<compile_context>
chip_gen: v5e
topology: v5e:2x2
jax: 0.10.0
libtpu: 0.0.40
codegen_flags: <defaults>
</compile_context>

<pallas_src>
import math
import functools

import jax
import jax.numpy as jnp
from jax import lax
from jax.experimental import pallas as pl
from jax.experimental.pallas import tpu as pltpu


def _attn_head_kernel(vlen_ref,             # (Bb, 1) int32 valid lengths
                      q_ref, k_ref, v_ref,  # (Bb, T, Din) f32
                      wq_ref, bq_ref,       # (Din, Np), (1, Np)
                      wk_ref, bk_ref,
                      wv_ref, bv_ref,
                      o_ref,                # (Bb, Tq, Np)
                      *, scale, compute_dtype):
    Bb, Tq, Din = q_ref.shape
    _, Tk, _ = k_ref.shape
    Np = o_ref.shape[-1]
    cdt = compute_dtype

    # --- Projections: flatten batch into M so the MXU sees (Bb*T, Din) tiles.
    q2 = q_ref[...].reshape(Bb * Tq, Din).astype(cdt)
    k2 = k_ref[...].reshape(Bb * Tk, Din).astype(cdt)
    v2 = v_ref[...].reshape(Bb * Tk, Din).astype(cdt)

    Q = jnp.dot(q2, wq_ref[...].astype(cdt), preferred_element_type=jnp.float32) + bq_ref[...]
    K = jnp.dot(k2, wk_ref[...].astype(cdt), preferred_element_type=jnp.float32) + bk_ref[...]
    V = jnp.dot(v2, wv_ref[...].astype(cdt), preferred_element_type=jnp.float32) + bv_ref[...]

    Q = (Q * scale).reshape(Bb, Tq, Np)   # fold 1/sqrt(d) into Q (cheaper than scaling scores)
    K = K.reshape(Bb, Tk, Np)
    V = V.reshape(Bb, Tk, Np)

    # --- Scores: batched contraction over the feature axis (no explicit transpose).
    scores = lax.dot_general(
        Q.astype(cdt), K.astype(cdt),
        dimension_numbers=(((2,), (2,)), ((0,), (0,))),
        preferred_element_type=jnp.float32)              # (Bb, Tq, Tk)

    # masked_softmax semantics: key positions j >= valid_lens[b] set to -1e6 pre-softmax.
    vlen = vlen_ref[...]                                  # (Bb, 1)
    col = lax.broadcasted_iota(jnp.int32, scores.shape, 2)
    scores = jnp.where(col < vlen[:, :, None], scores, jnp.float32(-1000000.0))

    # Numerically-stable softmax; reciprocal goes to the EUP slot (approx vrcp).
    m = jnp.max(scores, axis=-1, keepdims=True)
    e = jnp.exp(scores - m)
    p = e * pl.reciprocal(jnp.sum(e, axis=-1, keepdims=True), approx=True)

    # --- Attention-weighted values: (Bb, Tq, Np).
    out = lax.dot_general(
        p.astype(cdt), V.astype(cdt),
        dimension_numbers=(((2,), (1,)), ((0,), (0,))),
        preferred_element_type=jnp.float32)
    o_ref[...] = out.astype(o_ref.dtype)


def _pick_batch_block(B, T, target_m=256):
    """Pick a batch block Bb (divisor of B) so M = Bb*T is MXU-sized.

    The (Bb, 1) valid-lens block requires Bb == B or Bb % 8 == 0 (sublane rule).
    """
    for d in range(1, B + 1):
        if B % d:
            continue
        if d != B and d % 8:
            continue
        if d * T >= target_m:
            return d
    return B


def attention_head(queries, keys, values, params, valid_lens=None,
                   *, compute_dtype=jnp.float32, batch_block=None):
    """Pallas implementation of AttentionHead.forward.

    queries: (B, Tq, D_in), keys/values: (B, Tk, D_in), valid_lens: (B,) int or None.
    params: dict with w_q/w_k/w_v of shape (D_in, out_dim) (pre-transposed) and
            b_q/b_k/b_v of shape (1, out_dim).
    Returns (B, Tq, out_dim) float32.
    """
    B, Tq, Din = queries.shape
    _, Tk, _ = keys.shape
    out_dim = params["w_q"].shape[1]

    # Lane-dense padded projection width (multiple of 128); zero-pad weights/biases.
    Np = ((out_dim + 127) // 128) * 128
    pad = Np - out_dim
    pad_w = (lambda w: jnp.pad(w, ((0, 0), (0, pad)))) if pad else (lambda w: w)
    pad_b = (lambda b: jnp.pad(b, ((0, 0), (0, pad)))) if pad else (lambda b: b)
    wq, bq = pad_w(params["w_q"]), pad_b(params["b_q"])
    wk, bk = pad_w(params["w_k"]), pad_b(params["b_k"])
    wv, bv = pad_w(params["w_v"]), pad_b(params["b_v"])

    if valid_lens is None:
        vlen = jnp.full((B, 1), Tk, dtype=jnp.int32)     # no mask == all keys valid
    else:
        vlen = valid_lens.astype(jnp.int32).reshape(B, 1)

    Bb = batch_block if batch_block is not None else _pick_batch_block(B, max(Tq, Tk))
    grid = (B // Bb,)

    kernel = functools.partial(
        _attn_head_kernel,
        scale=1.0 / math.sqrt(out_dim),
        compute_dtype=compute_dtype)

    grid_spec = pltpu.PrefetchScalarGridSpec(
        num_scalar_prefetch=0,
        grid=grid,
        in_specs=[
            pl.BlockSpec((Bb, 1), lambda b: (b, 0)),            # valid lens
            pl.BlockSpec((Bb, Tq, Din), lambda b: (b, 0, 0)),   # queries
            pl.BlockSpec((Bb, Tk, Din), lambda b: (b, 0, 0)),   # keys
            pl.BlockSpec((Bb, Tk, Din), lambda b: (b, 0, 0)),   # values
            pl.BlockSpec((Din, Np), lambda b: (0, 0)),          # w_q (resident)
            pl.BlockSpec((1, Np), lambda b: (0, 0)),            # b_q
            pl.BlockSpec((Din, Np), lambda b: (0, 0)),          # w_k
            pl.BlockSpec((1, Np), lambda b: (0, 0)),            # b_k
            pl.BlockSpec((Din, Np), lambda b: (0, 0)),          # w_v
            pl.BlockSpec((1, Np), lambda b: (0, 0)),            # b_v
        ],
        out_specs=pl.BlockSpec((Bb, Tq, Np), lambda b: (b, 0, 0)),
    )

    out = pl.pallas_call(
        kernel,
        grid_spec=grid_spec,
        out_shape=jax.ShapeDtypeStruct((B, Tq, Np), jnp.float32),
        compiler_params=pltpu.CompilerParams(
            dimension_semantics=("parallel",)),
    )(vlen, queries, keys, values, wq, bq, wk, bk, wv, bv)

    return out[..., :out_dim] if pad else out


def init_params(key, in_dim, out_dim):
    """Deterministic init matching nn.Linear shapes (stored transposed: (in, out))."""
    ks = jax.random.split(key, 6)
    bound = 1.0 / math.sqrt(in_dim)
    u = lambda k, shape: jax.random.uniform(k, shape, jnp.float32, -bound, bound)
    return {
        "w_q": u(ks[0], (in_dim, out_dim)), "b_q": u(ks[1], (1, out_dim)),
        "w_k": u(ks[2], (in_dim, out_dim)), "b_k": u(ks[3], (1, out_dim)),
        "w_v": u(ks[4], (in_dim, out_dim)), "b_v": u(ks[5], (1, out_dim)),
    }


if __name__ == "__main__":
    # Small shapes consistent with the module: batch=2, seq=8, hidden=32, out_dim=64.
    B, Tq, Tk, Din, out_dim = 2, 8, 8, 32, 64

    root = jax.random.PRNGKey(0)
    kq, kk, kv, kp = jax.random.split(root, 4)
    queries = jax.random.normal(kq, (B, Tq, Din), jnp.float32)
    keys = jax.random.normal(kk, (B, Tk, Din), jnp.float32)
    values = jax.random.normal(kv, (B, Tk, Din), jnp.float32)
    valid_lens = jnp.array([5, 8], dtype=jnp.int32)

    params = init_params(kp, Din, out_dim)

    out = attention_head(queries, keys, values, params, valid_lens)
    jax.block_until_ready(out)

    # Pure-JAX reference sanity check (matches the PyTorch forward).
    def ref(q, k, v, p, vl):
        Q = q @ p["w_q"] + p["b_q"]
        K = k @ p["w_k"] + p["b_k"]
        V = v @ p["w_v"] + p["b_v"]
        s = jnp.einsum("bqd,bkd->bqk", Q, K) / math.sqrt(out_dim)
        mask = jnp.arange(Tk)[None, None, :] < vl[:, None, None]
        s = jnp.where(mask, s, -1000000.0)
        w = jax.nn.softmax(s, axis=-1)
        return jnp.einsum("bqk,bkd->bqd", w, V)

    expected = ref(queries, keys, values, params, valid_lens)
    assert out.shape == expected.shape
    # Tolerance covers the approx-reciprocal (EUP vrcp, ~2^-12 rel error).
    assert jnp.allclose(out, expected, atol=2e-3, rtol=2e-3), "mismatch vs reference (masked)"

    # Also exercise the no-mask path (valid_lens=None -> plain softmax).
    out_nm = attention_head(queries, keys, values, params, None)
    exp_nm = ref(queries, keys, values, params, jnp.full((B,), Tk, jnp.int32))
    assert jnp.allclose(out_nm, exp_nm, atol=2e-3, rtol=2e-3), "mismatch vs reference (no mask)"

    print("KERNEL_OK")
</pallas_src>

<mosaic_0001>
module attributes {stable_mosaic.version = 11 : i64} {
  func.func @_attn_head_kernel(%arg0: i32, %arg1: memref<2x1xi32, #tpu.memory_space<vmem>>, %arg2: memref<2x8x32xf32, #tpu.memory_space<vmem>>, %arg3: memref<2x8x32xf32, #tpu.memory_space<vmem>>, %arg4: memref<2x8x32xf32, #tpu.memory_space<vmem>>, %arg5: memref<32x128xf32, #tpu.memory_space<vmem>>, %arg6: memref<1x128xf32, #tpu.memory_space<vmem>>, %arg7: memref<32x128xf32, #tpu.memory_space<vmem>>, %arg8: memref<1x128xf32, #tpu.memory_space<vmem>>, %arg9: memref<32x128xf32, #tpu.memory_space<vmem>>, %arg10: memref<1x128xf32, #tpu.memory_space<vmem>>, %arg11: memref<2x8x128xf32, #tpu.memory_space<vmem>>) attributes {dimension_semantics = [#tpu.dimension_semantics<parallel>], iteration_bounds = array<i64: 1>, scalar_prefetch = 0 : i64, scratch_operands = 0 : i64, tpu.core_type = #tpu.core_type<tc>, window_params = [{transform_indices = @transform_0, window_bounds = array<i64: 2, 1>}, {transform_indices = @transform_1, window_bounds = array<i64: 2, 8, 32>}, {transform_indices = @transform_2, window_bounds = array<i64: 2, 8, 32>}, {transform_indices = @transform_3, window_bounds = array<i64: 2, 8, 32>}, {pipeline_mode = #tpu.pipeline_mode<synchronous>, transform_indices = @transform_4, window_bounds = array<i64: 32, 128>}, {pipeline_mode = #tpu.pipeline_mode<synchronous>, transform_indices = @transform_5, window_bounds = array<i64: 1, 128>}, {pipeline_mode = #tpu.pipeline_mode<synchronous>, transform_indices = @transform_6, window_bounds = array<i64: 32, 128>}, {pipeline_mode = #tpu.pipeline_mode<synchronous>, transform_indices = @transform_7, window_bounds = array<i64: 1, 128>}, {pipeline_mode = #tpu.pipeline_mode<synchronous>, transform_indices = @transform_8, window_bounds = array<i64: 32, 128>}, {pipeline_mode = #tpu.pipeline_mode<synchronous>, transform_indices = @transform_9, window_bounds = array<i64: 1, 128>}, {transform_indices = @transform_10, window_bounds = array<i64: 2, 8, 128>}]} {
    %c0 = arith.constant 0 : index
    %c0_0 = arith.constant 0 : index
    %c0_1 = arith.constant 0 : index
    %0 = vector.load %arg2[%c0, %c0_0, %c0_1] : memref<2x8x32xf32, #tpu.memory_space<vmem>>, vector<2x8x32xf32>
    %1 = vector.shape_cast %0 : vector<2x8x32xf32> to vector<16x32xf32>
    %c0_2 = arith.constant 0 : index
    %c0_3 = arith.constant 0 : index
    %c0_4 = arith.constant 0 : index
    %2 = vector.load %arg3[%c0_2, %c0_3, %c0_4] : memref<2x8x32xf32, #tpu.memory_space<vmem>>, vector<2x8x32xf32>
    %3 = vector.shape_cast %2 : vector<2x8x32xf32> to vector<16x32xf32>
    %c0_5 = arith.constant 0 : index
    %c0_6 = arith.constant 0 : index
    %c0_7 = arith.constant 0 : index
    %4 = vector.load %arg4[%c0_5, %c0_6, %c0_7] : memref<2x8x32xf32, #tpu.memory_space<vmem>>, vector<2x8x32xf32>
    %5 = vector.shape_cast %4 : vector<2x8x32xf32> to vector<16x32xf32>
    %c0_8 = arith.constant 0 : index
    %c0_9 = arith.constant 0 : index
    %6 = vector.load %arg5[%c0_8, %c0_9] : memref<32x128xf32, #tpu.memory_space<vmem>>, vector<32x128xf32>
    %cst = arith.constant dense<0.000000e+00> : vector<16x128xf32>
    %7 = tpu.matmul %1, %6, %cst {dimension_numbers = #tpu.dot_dimension_numbers<[1], [0], [0], [1], [0, 0, 1, 1], [], []>} : vector<16x32xf32>, vector<32x128xf32>, vector<16x128xf32> -> vector<16x128xf32>
    %c0_10 = arith.constant 0 : index
    %c0_11 = arith.constant 0 : index
    %8 = vector.load %arg6[%c0_10, %c0_11] : memref<1x128xf32, #tpu.memory_space<vmem>>, vector<1x128xf32>
    %9 = vector.broadcast %8 : vector<1x128xf32> to vector<16x128xf32>
    %10 = arith.addf %7, %9 : vector<16x128xf32>
    %c0_12 = arith.constant 0 : index
    %c0_13 = arith.constant 0 : index
    %11 = vector.load %arg7[%c0_12, %c0_13] : memref<32x128xf32, #tpu.memory_space<vmem>>, vector<32x128xf32>
    %cst_14 = arith.constant dense<0.000000e+00> : vector<16x128xf32>
    %12 = tpu.matmul %3, %11, %cst_14 {dimension_numbers = #tpu.dot_dimension_numbers<[1], [0], [0], [1], [0, 0, 1, 1], [], []>} : vector<16x32xf32>, vector<32x128xf32>, vector<16x128xf32> -> vector<16x128xf32>
    %c0_15 = arith.constant 0 : index
    %c0_16 = arith.constant 0 : index
    %13 = vector.load %arg8[%c0_15, %c0_16] : memref<1x128xf32, #tpu.memory_space<vmem>>, vector<1x128xf32>
    %14 = vector.broadcast %13 : vector<1x128xf32> to vector<16x128xf32>
    %15 = arith.addf %12, %14 : vector<16x128xf32>
    %c0_17 = arith.constant 0 : index
    %c0_18 = arith.constant 0 : index
    %16 = vector.load %arg9[%c0_17, %c0_18] : memref<32x128xf32, #tpu.memory_space<vmem>>, vector<32x128xf32>
    %cst_19 = arith.constant dense<0.000000e+00> : vector<16x128xf32>
    %17 = tpu.matmul %5, %16, %cst_19 {dimension_numbers = #tpu.dot_dimension_numbers<[1], [0], [0], [1], [0, 0, 1, 1], [], []>} : vector<16x32xf32>, vector<32x128xf32>, vector<16x128xf32> -> vector<16x128xf32>
    %c0_20 = arith.constant 0 : index
    %c0_21 = arith.constant 0 : index
    %18 = vector.load %arg10[%c0_20, %c0_21] : memref<1x128xf32, #tpu.memory_space<vmem>>, vector<1x128xf32>
    %19 = vector.broadcast %18 : vector<1x128xf32> to vector<16x128xf32>
    %20 = arith.addf %17, %19 : vector<16x128xf32>
    %cst_22 = arith.constant 1.250000e-01 : f32
    %21 = vector.broadcast %cst_22 : f32 to vector<16x128xf32>
    %22 = arith.mulf %10, %21 : vector<16x128xf32>
    %23 = vector.shape_cast %22 : vector<16x128xf32> to vector<2x8x128xf32>
    %24 = vector.shape_cast %15 : vector<16x128xf32> to vector<2x8x128xf32>
    %25 = vector.shape_cast %20 : vector<16x128xf32> to vector<2x8x128xf32>
    %cst_23 = arith.constant dense<0.000000e+00> : vector<2x8x8xf32>
    %26 = tpu.matmul %23, %24, %cst_23 {dimension_numbers = #tpu.dot_dimension_numbers<[2], [2], [1], [1], [0, 0, 0, 1, 1, 1], [0], [0]>} : vector<2x8x128xf32>, vector<2x8x128xf32>, vector<2x8x8xf32> -> vector<2x8x8xf32>
    %c0_24 = arith.constant 0 : index
    %c0_25 = arith.constant 0 : index
    %27 = vector.load %arg1[%c0_24, %c0_25] : memref<2x1xi32, #tpu.memory_space<vmem>>, vector<2x1xi32>
    %28 = tpu.iota {dimensions = array<i32: 2>} : vector<2x8x8xi32>
    %29 = vector.shape_cast %27 : vector<2x1xi32> to vector<2x1x1xi32>
    %30 = vector.broadcast %29 : vector<2x1x1xi32> to vector<2x8x8xi32>
    %31 = arith.cmpi slt, %28, %30 : vector<2x8x8xi32>
    %cst_26 = arith.constant -1.000000e+06 : f32
    %32 = vector.broadcast %cst_26 : f32 to vector<2x8x8xf32>
    %33 = arith.select %31, %26, %32 : vector<2x8x8xi1>, vector<2x8x8xf32>
    %cst_27 = arith.constant dense<0xFF800000> : vector<2x8xf32>
    %34 = vector.multi_reduction <maximumf>, %33, %cst_27 [2] : vector<2x8x8xf32> to vector<2x8xf32>
    %35 = vector.shape_cast %34 : vector<2x8xf32> to vector<2x8x1xf32>
    %36 = vector.broadcast %35 : vector<2x8x1xf32> to vector<2x8x8xf32>
    %37 = arith.subf %33, %36 : vector<2x8x8xf32>
    %38 = math.exp %37 : vector<2x8x8xf32>
    %cst_28 = arith.constant dense<0.000000e+00> : vector<2x8xf32>
    %39 = vector.multi_reduction <add>, %38, %cst_28 [2] : vector<2x8x8xf32> to vector<2x8xf32>
    %40 = vector.shape_cast %39 : vector<2x8xf32> to vector<2x8x1xf32>
    %41 = tpu.reciprocal %40 {approx = true} : vector<2x8x1xf32> -> vector<2x8x1xf32>
    %42 = vector.broadcast %41 : vector<2x8x1xf32> to vector<2x8x8xf32>
    %43 = arith.mulf %38, %42 : vector<2x8x8xf32>
    %cst_29 = arith.constant dense<0.000000e+00> : vector<2x8x128xf32>
    %44 = tpu.matmul %43, %25, %cst_29 {dimension_numbers = #tpu.dot_dimension_numbers<[2], [1], [1], [2], [0, 0, 0, 1, 1, 2], [0], [0]>} : vector<2x8x8xf32>, vector<2x8x128xf32>, vector<2x8x128xf32> -> vector<2x8x128xf32>
    %c0_30 = arith.constant 0 : index
    %c0_31 = arith.constant 0 : index
    %c0_32 = arith.constant 0 : index
    %45 = vector.load %arg11[%c0_30, %c0_31, %c0_32] : memref<2x8x128xf32, #tpu.memory_space<vmem>>, vector<2x8x128xf32>
    tpu.vector_store %arg11[%c0_30, %c0_31, %c0_32], %44 {strides = array<i32>} : memref<2x8x128xf32, #tpu.memory_space<vmem>>, vector<2x8x128xf32>,
    return
  }
  func.func @transform_0(%arg0: i32) -> (i32, i32) {
    %c0_i32 = arith.constant 0 : i32
    %c0_i32_0 = arith.constant 0 : i32
    return %arg0, %c0_i32 : i32, i32
  }
  func.func @transform_1(%arg0: i32) -> (i32, i32, i32) {
    %c0_i32 = arith.constant 0 : i32
    %c0_i32_0 = arith.constant 0 : i32
    %c0_i32_1 = arith.constant 0 : i32
    return %arg0, %c0_i32, %c0_i32_0 : i32, i32, i32
  }
  func.func @transform_2(%arg0: i32) -> (i32, i32, i32) {
    %c0_i32 = arith.constant 0 : i32
    %c0_i32_0 = arith.constant 0 : i32
    %c0_i32_1 = arith.constant 0 : i32
    return %arg0, %c0_i32, %c0_i32_0 : i32, i32, i32
  }
  func.func @transform_3(%arg0: i32) -> (i32, i32, i32) {
    %c0_i32 = arith.constant 0 : i32
    %c0_i32_0 = arith.constant 0 : i32
    %c0_i32_1 = arith.constant 0 : i32
    return %arg0, %c0_i32, %c0_i32_0 : i32, i32, i32
  }
  func.func @transform_4(%arg0: i32) -> (i32, i32) {
    %c0_i32 = arith.constant 0 : i32
    %c0_i32_0 = arith.constant 0 : i32
    %c0_i32_1 = arith.constant 0 : i32
    return %c0_i32, %c0_i32_0 : i32, i32
  }
  func.func @transform_5(%arg0: i32) -> (i32, i32) {
    %c0_i32 = arith.constant 0 : i32
    %c0_i32_0 = arith.constant 0 : i32
    %c0_i32_1 = arith.constant 0 : i32
    return %c0_i32, %c0_i32_0 : i32, i32
  }
  func.func @transform_6(%arg0: i32) -> (i32, i32) {
    %c0_i32 = arith.constant 0 : i32
    %c0_i32_0 = arith.constant 0 : i32
    %c0_i32_1 = arith.constant 0 : i32
    return %c0_i32, %c0_i32_0 : i32, i32
  }
  func.func @transform_7(%arg0: i32) -> (i32, i32) {
    %c0_i32 = arith.constant 0 : i32
    %c0_i32_0 = arith.constant 0 : i32
    %c0_i32_1 = arith.constant 0 : i32
    return %c0_i32, %c0_i32_0 : i32, i32
  }
  func.func @transform_8(%arg0: i32) -> (i32, i32) {
    %c0_i32 = arith.constant 0 : i32
    %c0_i32_0 = arith.constant 0 : i32
    %c0_i32_1 = arith.constant 0 : i32
    return %c0_i32, %c0_i32_0 : i32, i32
  }
  func.func @transform_9(%arg0: i32) -> (i32, i32) {
    %c0_i32 = arith.constant 0 : i32
    %c0_i32_0 = arith.constant 0 : i32
    %c0_i32_1 = arith.constant 0 : i32
    return %c0_i32, %c0_i32_0 : i32, i32
  }
  func.func @transform_10(%arg0: i32) -> (i32, i32, i32) {
    %c0_i32 = arith.constant 0 : i32
    %c0_i32_0 = arith.constant 0 : i32
    %c0_i32_1 = arith.constant 0 : i32
    return %arg0, %c0_i32, %c0_i32_0 : i32, i32, i32
  }
}

</mosaic_0001>

<llo_original>
// kernel: tpu_custom_call.1
$region0: #{tpu_custom_call.1}
  #allocation0 [shape = 'u32[]', space=smem, size = 0x4, offset = 0x4, fixed_abs, tag = 'smem constant byte address 0x4 - core index']
  #allocation1 [shape = 'u32[72,128]{1,0:T(1,128)}', space=vmem, size = 0x9000, scoped, tag = 'internal scratch']
  %s0 = inlined_call_operand.vmem [shape: s32[2,1], index: 0, kind: input, shape index: {}]
  %s1 = inlined_call_operand.hbm [shape: f32[2,8,32], index: 1, kind: input, shape index: {}]
  %s2 = inlined_call_operand.hbm [shape: f32[2,8,32], index: 2, kind: input, shape index: {}]
  %s3 = inlined_call_operand.hbm [shape: f32[2,8,32], index: 3, kind: input, shape index: {}]
  %s4 = inlined_call_operand.hbm [shape: f32[32,128], index: 4, kind: input, shape index: {}]
  %s5 = inlined_call_operand.vmem [shape: f32[1,128], index: 5, kind: input, shape index: {}]
  %s6 = inlined_call_operand.hbm [shape: f32[32,128], index: 6, kind: input, shape index: {}]
  %s7 = inlined_call_operand.vmem [shape: f32[1,128], index: 7, kind: input, shape index: {}]
  %s8 = inlined_call_operand.hbm [shape: f32[32,128], index: 8, kind: input, shape index: {}]
  %s9 = inlined_call_operand.vmem [shape: f32[1,128], index: 9, kind: input, shape index: {}]
  %s10 = inlined_call_operand.hbm [shape: f32[2,8,128], index: 10, kind: output, shape index: {}]
  %s11 = sld [smem:[#allocation0]]
  $region74: #{tpu_custom_call.1} parent=0
    _
  %s13 = ssub.s32 1, %s11
  %s14 = scalar_select 0, %s13, %s11
  $region1: #{tpu_custom_call.1} parent=0
    #allocation2 [shape = 'u8[8192]{0}', space=vmem, size = 0x2000, scoped, tag = 'input window, operand 1, single buffered']
    #allocation3 [shape = 's32[1]{0}', space=sflag, size = 0x4, scoped, tag = 'scoped memory for tpu_custom_call.1']
    #allocation4 [shape = 's32[1]{0}', space=sflag, size = 0x4, scoped, tag = 'scoped memory for tpu_custom_call.1']
    #allocation5 [shape = 'u8[8192]{0}', space=vmem, size = 0x2000, scoped, tag = 'input window, operand 2, single buffered']
    #allocation6 [shape = 's32[1]{0}', space=sflag, size = 0x4, scoped, tag = 'scoped memory for tpu_custom_call.1']
    #allocation7 [shape = 'u8[8192]{0}', space=vmem, size = 0x2000, scoped, tag = 'input window, operand 3, single buffered']
    #allocation8 [shape = 'u8[16384]{0}', space=vmem, size = 0x4000, scoped, tag = 'input window, operand 4, single buffered']
    #allocation9 [shape = 's32[1]{0}', space=sflag, size = 0x4, scoped, tag = 'scoped memory for tpu_custom_call.1']
    #allocation10 [shape = 'u8[16384]{0}', space=vmem, size = 0x4000, scoped, tag = 'input window, operand 6, single buffered']
    #allocation11 [shape = 'u8[16384]{0}', space=vmem, size = 0x4000, scoped, tag = 'input window, operand 8, single buffered']
    #allocation12 [shape = 's32[1]{0}', space=sflag, size = 0x4, scoped, tag = 'scoped memory for tpu_custom_call.1']
    #allocation13 [shape = 'u8[8192]{0}', space=vmem, size = 0x2000, scoped, tag = 'output window, operand 0, single buffered']
    %15 = vsyncpa [#allocation3], 0
    %16 = vsyncpa [#allocation6], 0
    %17 = vsyncpa [#allocation9], 0
    %18 = vsyncpa [#allocation12], 0
    %19 = vsyncpa [#allocation4], 0
    // Predicated region
    $region2: #{tpu_custom_call.1} parent=1 // pred_check
      _
    $region3: #{tpu_custom_call.1} parent=1 // pred_check_branch
      %21 = sbr.rel (0) target = $region5
    $region4: #{tpu_custom_call.1} parent=1 // pred_region
      _
    $region5: #{tpu_custom_call.1} parent=1 // pred_fallthru
      _
    // Predicated region
    $region6: #{tpu_custom_call.1} parent=1 // pred_check
      _
    $region7: #{tpu_custom_call.1} parent=1 // pred_check_branch
      %23 = sbr.rel (0) target = $region9
    $region8: #{tpu_custom_call.1} parent=1 // pred_region
      %25 = vsyncadd [#allocation3], 0
      %s26 = sshll.u32 %s1, 4
      %s27 = int_to_ptr.hbm [resolvable:$true] %s26
      %s28 = sshll.u32 [#allocation2], 4
      %s29 = int_to_ptr.vmem [resolvable:$true] %s28
      %34 = dma.hbm_to_vmem [thread:$0]  %s27, 256, %s29, [#allocation3], 128, 128, 8
    $region9: #{tpu_custom_call.1} parent=1 // pred_fallthru
      _
    // Predicated region
    $region10: #{tpu_custom_call.1} parent=1 // pred_check
      _
    $region11: #{tpu_custom_call.1} parent=1 // pred_check_branch
      %36 = sbr.rel (0) target = $region13
    $region12: #{tpu_custom_call.1} parent=1 // pred_region
      %38 = vsyncadd [#allocation6], 0
      %s39 = sshll.u32 %s2, 4
      %s40 = int_to_ptr.hbm [resolvable:$true] %s39
      %s41 = sshll.u32 [#allocation5], 4
      %s42 = int_to_ptr.vmem [resolvable:$true] %s41
      %47 = dma.hbm_to_vmem [thread:$0]  %s40, 256, %s42, [#allocation6], 128, 128, 8
    $region13: #{tpu_custom_call.1} parent=1 // pred_fallthru
      _
    // Predicated region
    $region14: #{tpu_custom_call.1} parent=1 // pred_check
      _
    $region15: #{tpu_custom_call.1} parent=1 // pred_check_branch
      %49 = sbr.rel (0) target = $region17
    $region16: #{tpu_custom_call.1} parent=1 // pred_region
      %51 = vsyncadd [#allocation6], 0
      %s52 = sshll.u32 %s3, 4
      %s53 = int_to_ptr.hbm [resolvable:$true] %s52
      %s54 = sshll.u32 [#allocation7], 4
      %s55 = int_to_ptr.vmem [resolvable:$true] %s54
      %60 = dma.hbm_to_vmem [thread:$0]  %s53, 256, %s55, [#allocation6], 128, 128, 8
    $region17: #{tpu_custom_call.1} parent=1 // pred_fallthru
      _
    // Predicated region
    $region18: #{tpu_custom_call.1} parent=1 // pred_check
      _
    $region19: #{tpu_custom_call.1} parent=1 // pred_check_branch
      %62 = sbr.rel (0) target = $region21
    $region20: #{tpu_custom_call.1} parent=1 // pred_region
      %64 = vsyncadd [#allocation9], 0
      %s65 = sshll.u32 %s4, 4
      %s66 = int_to_ptr.hbm [resolvable:$true] %s65
      %s67 = sshll.u32 [#allocation8], 4
      %s68 = int_to_ptr.vmem [resolvable:$true] %s67
      %73 = dma.hbm_to_vmem [thread:$0]  %s66, 512, %s68, [#allocation9], 128, 128, 8
    $region21: #{tpu_custom_call.1} parent=1 // pred_fallthru
      _
    // Predicated region
    $region22: #{tpu_custom_call.1} parent=1 // pred_check
      _
    $region23: #{tpu_custom_call.1} parent=1 // pred_check_branch
      %75 = sbr.rel (0) target = $region25
    $region24: #{tpu_custom_call.1} parent=1 // pred_region
      _
    $region25: #{tpu_custom_call.1} parent=1 // pred_fallthru
      _
    // Predicated region
    $region26: #{tpu_custom_call.1} parent=1 // pred_check
      _
    $region27: #{tpu_custom_call.1} parent=1 // pred_check_branch
      %77 = sbr.rel (0) target = $region29
    $region28: #{tpu_custom_call.1} parent=1 // pred_region
      %79 = vsyncadd [#allocation9], 0
      %s80 = sshll.u32 %s6, 4
      %s81 = int_to_ptr.hbm [resolvable:$true] %s80
      %s82 = sshll.u32 [#allocation10], 4
      %s83 = int_to_ptr.vmem [resolvable:$true] %s82
      %88 = dma.hbm_to_vmem [thread:$0]  %s81, 512, %s83, [#allocation9], 128, 128, 8
    $region29: #{tpu_custom_call.1} parent=1 // pred_fallthru
      _
    // Predicated region
    $region30: #{tpu_custom_call.1} parent=1 // pred_check
      _
    $region31: #{tpu_custom_call.1} parent=1 // pred_check_branch
      %90 = sbr.rel (0) target = $region33
    $region32: #{tpu_custom_call.1} parent=1 // pred_region
      _
    $region33: #{tpu_custom_call.1} parent=1 // pred_fallthru
      _
    // Predicated region
    $region34: #{tpu_custom_call.1} parent=1 // pred_check
      _
    $region35: #{tpu_custom_call.1} parent=1 // pred_check_branch
      %92 = sbr.rel (0) target = $region37
    $region36: #{tpu_custom_call.1} parent=1 // pred_region
      %94 = vsyncadd [#allocation12], 0
      %s95 = sshll.u32 %s8, 4
      %s96 = int_to_ptr.hbm [resolvable:$true] %s95
      %s97 = sshll.u32 [#allocation11], 4
      %s98 = int_to_ptr.vmem [resolvable:$true] %s97
      %103 = dma.hbm_to_vmem [thread:$0]  %s96, 512, %s98, [#allocation12], 128, 128, 8
    $region37: #{tpu_custom_call.1} parent=1 // pred_fallthru
      _
    // Predicated region
    $region38: #{tpu_custom_call.1} parent=1 // pred_check
      _
    $region39: #{tpu_custom_call.1} parent=1 // pred_check_branch
      %105 = sbr.rel (0) target = $region41
    $region40: #{tpu_custom_call.1} parent=1 // pred_region
      _
    $region41: #{tpu_custom_call.1} parent=1 // pred_fallthru
      _
    // Predicated region
    $region42: #{tpu_custom_call.1} parent=1 // pred_check
      _
    $region43: #{tpu_custom_call.1} parent=1 // pred_check_branch
      %107 = sbr.rel (0) target = $region45
    $region44: #{tpu_custom_call.1} parent=1 // pred_region
      %109 = dma.done [#allocation3], 256
    $region45: #{tpu_custom_call.1} parent=1 // pred_fallthru
      _
    // Predicated region
    $region46: #{tpu_custom_call.1} parent=1 // pred_check
      _
    $region47: #{tpu_custom_call.1} parent=1 // pred_check_branch
      %111 = sbr.rel (0) target = $region49
    $region48: #{tpu_custom_call.1} parent=1 // pred_region
      %113 = dma.done [#allocation6], 256
    $region49: #{tpu_custom_call.1} parent=1 // pred_fallthru
      _
    // Predicated region
    $region50: #{tpu_custom_call.1} parent=1 // pred_check
      _
    $region51: #{tpu_custom_call.1} parent=1 // pred_check_branch
      %115 = sbr.rel (0) target = $region53
    $region52: #{tpu_custom_call.1} parent=1 // pred_region
      %117 = dma.done [#allocation6], 256
    $region53: #{tpu_custom_call.1} parent=1 // pred_fallthru
      _
    // Predicated region
    $region54: #{tpu_custom_call.1} parent=1 // pred_check
      _
    $region55: #{tpu_custom_call.1} parent=1 // pred_check_branch
      %119 = sbr.rel (0) target = $region57
    $region56: #{tpu_custom_call.1} parent=1 // pred_region
      %121 = dma.done [#allocation9], 512
    $region57: #{tpu_custom_call.1} parent=1 // pred_fallthru
      _
    // Predicated region
    $region58: #{tpu_custom_call.1} parent=1 // pred_check
      _
    $region59: #{tpu_custom_call.1} parent=1 // pred_check_branch
      %123 = sbr.rel (0) target = $region61
    $region60: #{tpu_custom_call.1} parent=1 // pred_region
      %125 = dma.done [#allocation9], 512
    $region61: #{tpu_custom_call.1} parent=1 // pred_fallthru
      _
    // Predicated region
    $region62: #{tpu_custom_call.1} parent=1 // pred_check
      _
    $region63: #{tpu_custom_call.1} parent=1 // pred_check_branch
      %127 = sbr.rel (0) target = $region65
    $region64: #{tpu_custom_call.1} parent=1 // pred_region
      %129 = dma.done [#allocation12], 512
    $region65: #{tpu_custom_call.1} parent=1 // pred_fallthru
      _
    %v130 = vld [vmem:[#allocation2] sm:$0xff]
    %v131 = vld [vmem:[#allocation2 + $0x8] sm:$0xff]
    %v132 = vld [vmem:[#allocation5] sm:$0xff]
    %v133 = vld [vmem:[#allocation5 + $0x8] sm:$0xff]
    %v134 = vld [vmem:[#allocation7] sm:$0xff]
    %v135 = vld [vmem:[#allocation7 + $0x8] sm:$0xff]
    %v136 = vld [vmem:[#allocation8] sm:$0xff]
    %v137 = vld [vmem:[#allocation8 + $0x8] sm:$0xff]
    %v138 = vld [vmem:[#allocation8 + $0x10] sm:$0xff]
    %v139 = vld [vmem:[#allocation8 + $0x18] sm:$0xff]
    %v140 = vld [vmem:[%s5] sm:$0x1]
    %v142 = vperm.slane %v140, 0
    %vm144 = vcmask 261120
    %v146 = vsel %vm144, %v130, 0
    %v149 = vsel %vm144, %v131, 0
    %151 = vmatpush.msra.mxu0 0.0
    %152 = vmatpush.msra.mxu0 0.0
    %153 = vmatpush.msra.mxu0 0.0
    %154 = vmatpush.msra.mxu0 0.0
    %155 = vmatpush.msra.mxu0 0.0
    %156 = vmatpush.msra.mxu0 0.0
    %157 = vmatpush.msra.mxu0 0.0
    %158 = vmatpush.msra.mxu0 0.0
    %159 = vmatpush.msra.mxu0 0.0
    %160 = vmatpush.msra.mxu0 0.0
    %161 = vmatpush.msra.mxu0 0.0
    %162 = vmatpush.msra.mxu0 0.0
    %163 = vmatpush.msra.mxu0 %v139
    %164 = vmatpush.msra.mxu0 %v138
    %165 = vmatpush.msra.mxu0 %v137
    %166 = vmatpush.msra.mxu0 %v136
    %167 = vmatmul.f32.gmra.mxu0 %v146
    %v168 = vpop.f32.mrf.mxu0
    %v169 = vadd.f32 %v142, %v168
    %170 = vmatmul.f32.gmra.mxu0 %v149
    %v171 = vpop.f32.mrf.mxu0
    %v172 = vadd.f32 %v142, %v171
    %173 = vdwg.mxu0
    %v174 = vld [vmem:[#allocation10] sm:$0xff]
    %v175 = vld [vmem:[#allocation10 + $0x8] sm:$0xff]
    %v176 = vld [vmem:[#allocation10 + $0x10] sm:$0xff]
    %v177 = vld [vmem:[#allocation10 + $0x18] sm:$0xff]
    %v178 = vld [vmem:[%s7] sm:$0x1]
    %v180 = vperm.slane %v178, 0
    %v183 = vsel %vm144, %v132, 0
    %v186 = vsel %vm144, %v133, 0
    %188 = vmatpush.msra.mxu0 0.0
    %189 = vmatpush.msra.mxu0 0.0
    %190 = vmatpush.msra.mxu0 0.0
    %191 = vmatpush.msra.mxu0 0.0
    %192 = vmatpush.msra.mxu0 0.0
    %193 = vmatpush.msra.mxu0 0.0
    %194 = vmatpush.msra.mxu0 0.0
    %195 = vmatpush.msra.mxu0 0.0
    %196 = vmatpush.msra.mxu0 0.0
    %197 = vmatpush.msra.mxu0 0.0
    %198 = vmatpush.msra.mxu0 0.0
    %199 = vmatpush.msra.mxu0 0.0
    %200 = vmatpush.msra.mxu0 %v177
    %201 = vmatpush.msra.mxu0 %v176
    %202 = vmatpush.msra.mxu0 %v175
    %203 = vmatpush.msra.mxu0 %v174
    %204 = vmatmul.f32.gmra.mxu0 %v183
    %v205 = vpop.f32.mrf.mxu0
    %v206 = vadd.f32 %v180, %v205
    %207 = vmatmul.f32.gmra.mxu0 %v186
    %v208 = vpop.f32.mrf.mxu0
    %v209 = vadd.f32 %v180, %v208
    %210 = vdwg.mxu0
    %v211 = vld [vmem:[#allocation11] sm:$0xff]
    %v212 = vld [vmem:[#allocation11 + $0x8] sm:$0xff]
    %v213 = vld [vmem:[#allocation11 + $0x10] sm:$0xff]
    %v214 = vld [vmem:[#allocation11 + $0x18] sm:$0xff]
    %v215 = vld [vmem:[%s9] sm:$0x1]
    %v217 = vperm.slane %v215, 0
    %v220 = vsel %vm144, %v134, 0
    %v223 = vsel %vm144, %v135, 0
    %225 = vmatpush.msra.mxu0 0.0
    %226 = vmatpush.msra.mxu0 0.0
    %227 = vmatpush.msra.mxu0 0.0
    %228 = vmatpush.msra.mxu0 0.0
    %229 = vmatpush.msra.mxu0 0.0
    %230 = vmatpush.msra.mxu0 0.0
    %231 = vmatpush.msra.mxu0 0.0
    %232 = vmatpush.msra.mxu0 0.0
    %233 = vmatpush.msra.mxu0 0.0
    %234 = vmatpush.msra.mxu0 0.0
    %235 = vmatpush.msra.mxu0 0.0
    %236 = vmatpush.msra.mxu0 0.0
    %237 = vmatpush.msra.mxu0 %v214
    %238 = vmatpush.msra.mxu0 %v213
    %239 = vmatpush.msra.mxu0 %v212
    %240 = vmatpush.msra.mxu0 %v211
    %241 = vmatmul.f32.gmra.mxu0 %v220
    %v242 = vpop.f32.mrf.mxu0
    %v243 = vadd.f32 %v217, %v242
    %244 = vmatmul.f32.gmra.mxu0 %v223
    %v245 = vpop.f32.mrf.mxu0
    %v246 = vadd.f32 %v217, %v245
    %247 = vdwg.mxu0
    %v248 = vmul.f32 %v169, 0.125
    %v249 = vmul.f32 %v172, 0.125
    %250 = vmatpush.xpose.msra.mxu0 0.0
    %251 = vmatpush.xpose.msra.mxu0 0.0
    %252 = vmatpush.xpose.msra.mxu0 0.0
    %253 = vmatpush.xpose.msra.mxu0 0.0
    %254 = vmatpush.xpose.msra.mxu0 0.0
    %255 = vmatpush.xpose.msra.mxu0 0.0
    %256 = vmatpush.xpose.msra.mxu0 0.0
    %257 = vmatpush.xpose.msra.mxu0 0.0
    %258 = vmatpush.xpose.msra.mxu0 0.0
    %259 = vmatpush.xpose.msra.mxu0 0.0
    %260 = vmatpush.xpose.msra.mxu0 0.0
    %261 = vmatpush.xpose.msra.mxu0 0.0
    %262 = vmatpush.xpose.msra.mxu0 0.0
    %263 = vmatpush.xpose.msra.mxu0 0.0
    %264 = vmatpush.xpose.msra.mxu0 0.0
    %265 = vmatpush.xpose.msra.mxu0 %v206
    %266 = vmatmul.f32.gmra.mxu0 %v248
    %v267 = vpop.f32.mrf.mxu0
    %v268 = vadd.f32 0.0, %v267
    %269 = vdwg.mxu0
    %270 = vmatpush.xpose.msra.mxu0 0.0
    %271 = vmatpush.xpose.msra.mxu0 0.0
    %272 = vmatpush.xpose.msra.mxu0 0.0
    %273 = vmatpush.xpose.msra.mxu0 0.0
    %274 = vmatpush.xpose.msra.mxu0 0.0
    %275 = vmatpush.xpose.msra.mxu0 0.0
    %276 = vmatpush.xpose.msra.mxu0 0.0
    %277 = vmatpush.xpose.msra.mxu0 0.0
    %278 = vmatpush.xpose.msra.mxu0 0.0
    %279 = vmatpush.xpose.msra.mxu0 0.0
    %280 = vmatpush.xpose.msra.mxu0 0.0
    %281 = vmatpush.xpose.msra.mxu0 0.0
    %282 = vmatpush.xpose.msra.mxu0 0.0
    %283 = vmatpush.xpose.msra.mxu0 0.0
    %284 = vmatpush.xpose.msra.mxu0 0.0
    %285 = vmatpush.xpose.msra.mxu0 %v209
    %286 = vmatmul.f32.gmra.mxu0 %v249
    %v287 = vpop.f32.mrf.mxu0
    %v288 = vadd.f32 0.0, %v287
    %289 = vdwg.mxu0
    %v290 = vld [vmem:[%s0] sm:$0x3]
    %v291 = vlaneseq
    %v292 = vand.u32 %v291, 127
    %v293 = vrot.slane %v290, 1
    %v294 = vperm.slane %v290, 0
    %v295 = vperm.slane %v293, 0
    %296 = vset.pattern.permute.xlu0 0
    %297 = vperm.xlu0 %296, %v294
    %v298 = vpop.permute.xlu0 %297
    %299 = vset.pattern.permute.xlu0 0
    %300 = vperm.xlu0 %299, %v295
    %v301 = vpop.permute.xlu0 %300
    %vm302 = vcmp.lt.s32.totalorder %v292, %v298
    %vm303 = vcmp.lt.s32.totalorder %v292, %v301
    %v304 = vsel %vm302, %v268, -1000000.0
    %v305 = vsel %vm303, %v288, -1000000.0
    %vm306 = vcmask 64512
    %v307 = vsel %vm306, %v304, -inf
    %308 = vmax.xlane.f32.xlu0 %v307
    %v309 = vpop.xlane.xlu0 %308
    %v310 = vsel %vm306, %v305, -inf
    %311 = vmax.xlane.f32.xlu0 %v310
    %v312 = vpop.xlane.xlu0 %311
    %v313 = vsub.f32 %v304, %v309
    %v314 = vsub.f32 %v305, %v312
    %v315 = vmul.f32 %v313, 1.442695
    %v316 = vpow.pop %v315
    %v317 = vmul.f32 %v314, 1.442695
    %v318 = vpow.pop %v317
    %v319 = vsel %vm306, %v316, 0.0
    %320 = vadd.xlane.f32.xlu0 %v319
    %v321 = vpop.xlane.xlu0 %320
    %v322 = vsel %vm306, %v318, 0.0
    %323 = vadd.xlane.f32.xlu0 %v322
    %v324 = vpop.xlane.xlu0 %323
    %v325 = vrcp.pop %v321
    %v326 = vrcp.pop %v324
    %v327 = vmul.f32 %v316, %v325
    %v328 = vmul.f32 %v318, %v326
    %v330 = vsel %vm306, %v327, 0
    %332 = vmatpush.msra.mxu0 0.0
    %333 = vmatpush.msra.mxu0 0.0
    %334 = vmatpush.msra.mxu0 0.0
    %335 = vmatpush.msra.mxu0 0.0
    %336 = vmatpush.msra.mxu0 0.0
    %337 = vmatpush.msra.mxu0 0.0
    %338 = vmatpush.msra.mxu0 0.0
    %339 = vmatpush.msra.mxu0 0.0
    %340 = vmatpush.msra.mxu0 0.0
    %341 = vmatpush.msra.mxu0 0.0
    %342 = vmatpush.msra.mxu0 0.0
    %343 = vmatpush.msra.mxu0 0.0
    %344 = vmatpush.msra.mxu0 0.0
    %345 = vmatpush.msra.mxu0 0.0
    %346 = vmatpush.msra.mxu0 0.0
    %347 = vmatpush.msra.mxu0 %v243
    %348 = vmatmul.f32.gmra.mxu0 %v330
    %v349 = vpop.f32.mrf.mxu0
    %v350 = vadd.f32 0.0, %v349
    %351 = vdwg.mxu0
    %v353 = vsel %vm306, %v328, 0
    %355 = vmatpush.msra.mxu0 0.0
    %356 = vmatpush.msra.mxu0 0.0
    %357 = vmatpush.msra.mxu0 0.0
    %358 = vmatpush.msra.mxu0 0.0
    %359 = vmatpush.msra.mxu0 0.0
    %360 = vmatpush.msra.mxu0 0.0
    %361 = vmatpush.msra.mxu0 0.0
    %362 = vmatpush.msra.mxu0 0.0
    %363 = vmatpush.msra.mxu0 0.0
    %364 = vmatpush.msra.mxu0 0.0
    %365 = vmatpush.msra.mxu0 0.0
    %366 = vmatpush.msra.mxu0 0.0
    %367 = vmatpush.msra.mxu0 0.0
    %368 = vmatpush.msra.mxu0 0.0
    %369 = vmatpush.msra.mxu0 0.0
    %370 = vmatpush.msra.mxu0 %v246
    %371 = vmatmul.f32.gmra.mxu0 %v353
    %v372 = vpop.f32.mrf.mxu0
    %v373 = vadd.f32 0.0, %v372
    %374 = vdwg.mxu0
    %375 = vst [vmem:[#allocation13] sm:$0xff] %v350
    %376 = vst [vmem:[#allocation13 + $0x8] sm:$0xff] %v373
    // Predicated region
    $region66: #{tpu_custom_call.1} parent=1 // pred_check
      _
    $region67: #{tpu_custom_call.1} parent=1 // pred_check_branch
      %378 = sbr.rel (0) target = $region69
    $region68: #{tpu_custom_call.1} parent=1 // pred_region
      %380 = vsyncadd [#allocation4], 0
      %s381 = sshll.u32 [#allocation13], 4
      %s382 = int_to_ptr.vmem [resolvable:$true] %s381
      %s383 = sshll.u32 %s10, 4
      %s384 = int_to_ptr.hbm [resolvable:$true] %s383
      %389 = dma.vmem_to_hbm [thread:$0]  %s382, 256, %s384, [#allocation4], 128, 128, 8
    $region69: #{tpu_custom_call.1} parent=1 // pred_fallthru
      _
    // Predicated region
    $region70: #{tpu_custom_call.1} parent=1 // pred_check
      _
    $region71: #{tpu_custom_call.1} parent=1 // pred_check_branch
      %391 = sbr.rel (0) target = $region73
    $region72: #{tpu_custom_call.1} parent=1 // pred_region
      %393 = dma.done [#allocation4], 256
    $region73: #{tpu_custom_call.1} parent=1 // pred_fallthru
      _
    %394 = vsyncpa [#allocation3], 1
    %395 = vsyncpa [#allocation6], 1
    %396 = vsyncpa [#allocation9], 1
    %397 = vsyncpa [#allocation12], 1
    %398 = vsyncpa [#allocation4], 1

</llo_original>
